<compile_context>
chip_gen: v7x
topology: tpu7x:2x2x1
jax: 0.10.0
libtpu: 0.0.40
codegen_flags: <defaults>
</compile_context>

<pallas_src>
import jax
import jax.numpy as jnp
from jax.experimental import pallas as pl
from jax.experimental.pallas import tpu as pltpu


def predictor_kernel(lens_ref,    # VMEM (TB, 1)       int32 sentence lengths
                     sent_ref,    # VMEM (TB, L, Ds)   sentence features (f32 or bf16)
                     vid_ref,     # VMEM (TB, T, Dv)   video features, natural layout
                     vmask_ref,   # VMEM (TB, T)       int8 clip mask {0,1}
                     ws_ref,      # VMEM (Ds, H)       f32 sentence projection (grid-invariant)
                     wvt_ref,     # VMEM (H, Dv)       f32 video projection^T (grid-invariant)
                     out_ref):    # VMEM (TB, T)       f32 logits
    TB, L, Ds = sent_ref.shape

    # ---- masked mean pool over sentence length (int32 compare, (TB, L) iota only) ----
    lens = lens_ref[...]                                              # (TB, 1) int32
    pos = jax.lax.broadcasted_iota(jnp.int32, (TB, L), 1)             # (TB, L)
    smask = (pos < lens).astype(jnp.float32)                          # (TB, L)
    sent = sent_ref[...].astype(jnp.float32)                          # in-register upcast (v5e-safe)
    pooled = jnp.sum(sent * smask[:, :, None], axis=1)                # (TB, Ds) f32
    pooled = pooled / jnp.maximum(lens, 1).astype(jnp.float32)        # guard slen == 0

    # ---- collapse both projections into a per-batch scoring vector u_b = W_v (W_s^T pooled_b) ----
    s = jnp.dot(pooled, ws_ref[...], preferred_element_type=jnp.float32)   # (TB, H)
    u = jnp.dot(s, wvt_ref[...], preferred_element_type=jnp.float32)       # (TB, Dv)
    u = u.astype(vid_ref.dtype)                                            # feed MXU at the feature dtype

    # ---- per-clip logits: one row per batch, written directly (no concatenate) ----
    neg_inf = jnp.float32(-1e9)
    for b in range(TB):                                               # TB is small & static
        row = jax.lax.dot_general(
            u[b:b + 1, :], vid_ref[b],
            dimension_numbers=(((1,), (1,)), ((), ())),               # (1,Dv) x (T,Dv)^T -> (1,T)
            preferred_element_type=jnp.float32)
        out_ref[b:b + 1, :] = jnp.where(vmask_ref[b:b + 1, :] != 0, row, neg_inf)


def _pick_batch_tile(B, T, Dv, itemsize, requested=None):
    """Video rows per grid step.

    Targets ~4 MiB of video DMA per step, keeps the double-buffered video block
    inside a ~40 MiB VMEM budget (v7x has only 64 MiB physical), uses a multiple
    of 8 (2-D block constraint), guarantees >= 2 grid steps when B allows (both
    v7x TensorCores), and prefers an exact divisor of B so the wrapper never has
    to pad the batch (padding would copy the whole video tensor once in XLA).
    """
    bytes_per_row = max(T * Dv * itemsize, 1)
    cap = max(1, (40 * 1024 * 1024) // (2 * bytes_per_row))          # double-buffered budget
    want = requested if requested is not None else max(1, (4 * 1024 * 1024) // bytes_per_row)
    tb = max(1, min(want, cap, 64, B))                               # 64: unrolled row-loop bound
    if B < 16:
        return B                                                     # single step, TB == B_pad
    tb = max(8, (min(tb, B // 2) // 8) * 8)
    for cand in range(tb, 7, -8):                                    # prefer exact divisor of B
        if B % cand == 0:
            return cand
    return tb                                                        # rare: accept a padded tail


def base_predictor_forward(sentence_features, sentence_length, video_features,
                           video_masks, w_sent, w_vid, *, batch_tile=None):
    B, L, Ds = sentence_features.shape
    _, T, Dv = video_features.shape
    H = w_sent.shape[1]

    # Features stream at their stored dtype (store them in bf16 upstream to halve
    # HBM traffic); no forced cast here (a cast would itself be an extra HBM pass).
    feat_itemsize = jnp.dtype(video_features.dtype).itemsize
    lens = sentence_length.astype(jnp.int32).reshape(B, 1)
    vmask = video_masks.reshape(B, T).astype(jnp.int8)               # 1 byte/clip of DMA
    ws = w_sent.astype(jnp.float32)                                  # tiny, grid-invariant
    wvt = jnp.transpose(w_vid.astype(jnp.float32), (1, 0))           # (H, Dv)

    TB = _pick_batch_tile(B, T, Dv, feat_itemsize, batch_tile)
    B_pad = ((B + TB - 1) // TB) * TB

    sent = sentence_features
    vid = video_features
    if B_pad != B:                                                   # avoided whenever TB | B
        pb = B_pad - B
        sent = jnp.pad(sent, ((0, pb), (0, 0), (0, 0)))
        vid = jnp.pad(vid, ((0, pb), (0, 0), (0, 0)))
        lens = jnp.pad(lens, ((0, pb), (0, 0)))                      # 0-length -> guarded in kernel
        vmask = jnp.pad(vmask, ((0, pb), (0, 0)))

    grid = (B_pad // TB,)
    grid_spec = pltpu.PrefetchScalarGridSpec(
        num_scalar_prefetch=0,
        grid=grid,
        in_specs=[
            pl.BlockSpec((TB, 1), lambda i: (i, 0)),
            pl.BlockSpec((TB, L, Ds), lambda i: (i, 0, 0)),
            pl.BlockSpec((TB, T, Dv), lambda i: (i, 0, 0)),
            pl.BlockSpec((TB, T), lambda i: (i, 0)),
            # grid-invariant weights: constant index_map -> fetched once, stays resident
            pl.BlockSpec((Ds, H), lambda i: (0, 0)),
            pl.BlockSpec((H, Dv), lambda i: (0, 0)),
        ],
        out_specs=pl.BlockSpec((TB, T), lambda i: (i, 0)),
    )

    out = pl.pallas_call(
        predictor_kernel,
        out_shape=jax.ShapeDtypeStruct((B_pad, T), jnp.float32),
        grid_spec=grid_spec,
        compiler_params=pltpu.CompilerParams(
            dimension_semantics=("parallel",),
            vmem_limit_bytes=48 * 1024 * 1024),
    )(lens, sent, vid, vmask, ws, wvt)

    return out[:B]


def reference_forward(sentence_features, sentence_length, video_features,
                      video_masks, w_sent, w_vid):
    B, L, Ds = sentence_features.shape
    pos = jnp.arange(L)[None, :, None]
    smask = (pos < sentence_length[:, None, None]).astype(jnp.float32)
    pooled = (sentence_features * smask).sum(1) / sentence_length[:, None].astype(jnp.float32)
    s = pooled @ w_sent                                   # (B, H)
    v = jnp.einsum("btd,dh->bth", video_features, w_vid)  # (B, T, H)
    logits = jnp.einsum("bth,bh->bt", v, s)
    return jnp.where(video_masks > 0.0, logits, -1e9)


if __name__ == "__main__":
    B, L, Ds = 2, 8, 32
    T, Dv, H = 16, 32, 32

    key = jax.random.PRNGKey(0)
    k1, k2, k3, k4 = jax.random.split(key, 4)

    sentence_features = jax.random.normal(k1, (B, L, Ds), dtype=jnp.float32)
    video_features = jax.random.normal(k2, (B, T, Dv), dtype=jnp.float32)
    sentence_length = jnp.array([5, 8], dtype=jnp.int32)
    # last 4 clips of batch 1 are padding
    video_masks = jnp.concatenate(
        [jnp.ones((1, T), jnp.float32),
         jnp.concatenate([jnp.ones((1, T - 4), jnp.float32),
                          jnp.zeros((1, 4), jnp.float32)], axis=1)], axis=0)

    w_sent = jax.random.normal(k3, (Ds, H), dtype=jnp.float32) * 0.05
    w_vid = jax.random.normal(k4, (Dv, H), dtype=jnp.float32) * 0.05

    # --- f32 feature path: matches the fp32 reference tightly ---
    pred32 = base_predictor_forward(sentence_features, sentence_length,
                                    video_features, video_masks, w_sent, w_vid)
    pred32 = jax.block_until_ready(pred32)
    ref32 = reference_forward(sentence_features, sentence_length,
                              video_features, video_masks, w_sent, w_vid)
    assert pred32.shape == (B, T)
    assert jnp.allclose(pred32, ref32, atol=1e-4, rtol=1e-4), "f32 mismatch vs reference"

    # --- bf16 feature path (what production should store: halves HBM traffic) ---
    sent_bf = sentence_features.astype(jnp.bfloat16)
    vid_bf = video_features.astype(jnp.bfloat16)
    pred_bf = base_predictor_forward(sent_bf, sentence_length,
                                     vid_bf, video_masks, w_sent, w_vid)
    pred_bf = jax.block_until_ready(pred_bf)
    ref_bf = reference_forward(sent_bf.astype(jnp.float32), sentence_length,
                               vid_bf.astype(jnp.float32), video_masks, w_sent, w_vid)
    assert pred_bf.shape == (B, T)
    assert jnp.allclose(pred_bf, ref_bf, atol=3e-2, rtol=3e-2), "bf16 mismatch vs reference"

    print("KERNEL_OK")
</pallas_src>

<mosaic_0001>
module attributes {stable_mosaic.version = 11 : i64} {
  func.func @predictor_kernel(%arg0: i32, %arg1: memref<2x1xi32, #tpu.memory_space<vmem>>, %arg2: memref<2x8x32xf32, #tpu.memory_space<vmem>>, %arg3: memref<2x16x32xf32, #tpu.memory_space<vmem>>, %arg4: memref<2x16xi8, #tpu.memory_space<vmem>>, %arg5: memref<32x32xf32, #tpu.memory_space<vmem>>, %arg6: memref<32x32xf32, #tpu.memory_space<vmem>>, %arg7: memref<2x16xf32, #tpu.memory_space<vmem>>) attributes {dimension_semantics = [#tpu.dimension_semantics<parallel>], iteration_bounds = array<i64: 1>, scalar_prefetch = 0 : i64, scratch_operands = 0 : i64, tpu.core_type = #tpu.core_type<tc>, window_params = [{transform_indices = @transform_0, window_bounds = array<i64: 2, 1>}, {transform_indices = @transform_1, window_bounds = array<i64: 2, 8, 32>}, {transform_indices = @transform_2, window_bounds = array<i64: 2, 16, 32>}, {transform_indices = @transform_3, window_bounds = array<i64: 2, 16>}, {pipeline_mode = #tpu.pipeline_mode<synchronous>, transform_indices = @transform_4, window_bounds = array<i64: 32, 32>}, {pipeline_mode = #tpu.pipeline_mode<synchronous>, transform_indices = @transform_5, window_bounds = array<i64: 32, 32>}, {transform_indices = @transform_6, window_bounds = array<i64: 2, 16>}]} {
    %c0 = arith.constant 0 : index
    %c0_0 = arith.constant 0 : index
    %0 = vector.load %arg1[%c0, %c0_0] : memref<2x1xi32, #tpu.memory_space<vmem>>, vector<2x1xi32>
    %1 = tpu.iota {dimensions = array<i32: 1>} : vector<2x8xi32>
    %2 = vector.broadcast %0 : vector<2x1xi32> to vector<2x8xi32>
    %3 = arith.cmpi slt, %1, %2 : vector<2x8xi32>
    %4 = arith.extui %3 : vector<2x8xi1> to vector<2x8xi32>
    %5 = arith.sitofp %4 : vector<2x8xi32> to vector<2x8xf32>
    %c0_1 = arith.constant 0 : index
    %c0_2 = arith.constant 0 : index
    %c0_3 = arith.constant 0 : index
    %6 = vector.load %arg2[%c0_1, %c0_2, %c0_3] : memref<2x8x32xf32, #tpu.memory_space<vmem>>, vector<2x8x32xf32>
    %7 = vector.shape_cast %5 : vector<2x8xf32> to vector<2x8x1xf32>
    %8 = vector.broadcast %7 : vector<2x8x1xf32> to vector<2x8x32xf32>
    %9 = arith.mulf %6, %8 : vector<2x8x32xf32>
    %cst = arith.constant dense<0.000000e+00> : vector<2x32xf32>
    %10 = vector.multi_reduction <add>, %9, %cst [1] : vector<2x8x32xf32> to vector<2x32xf32>
    %c1_i32 = arith.constant 1 : i32
    %11 = vector.broadcast %c1_i32 : i32 to vector<2x1xi32>
    %12 = arith.maxsi %0, %11 : vector<2x1xi32>
    %13 = arith.sitofp %12 : vector<2x1xi32> to vector<2x1xf32>
    %14 = vector.broadcast %13 : vector<2x1xf32> to vector<2x32xf32>
    %15 = arith.divf %10, %14 : vector<2x32xf32>
    %c0_4 = arith.constant 0 : index
    %c0_5 = arith.constant 0 : index
    %16 = vector.load %arg5[%c0_4, %c0_5] : memref<32x32xf32, #tpu.memory_space<vmem>>, vector<32x32xf32>
    %cst_6 = arith.constant dense<0.000000e+00> : vector<2x32xf32>
    %17 = tpu.matmul %15, %16, %cst_6 {dimension_numbers = #tpu.dot_dimension_numbers<[1], [0], [0], [1], [0, 0, 1, 1], [], []>} : vector<2x32xf32>, vector<32x32xf32>, vector<2x32xf32> -> vector<2x32xf32>
    %c0_7 = arith.constant 0 : index
    %c0_8 = arith.constant 0 : index
    %18 = vector.load %arg6[%c0_7, %c0_8] : memref<32x32xf32, #tpu.memory_space<vmem>>, vector<32x32xf32>
    %cst_9 = arith.constant dense<0.000000e+00> : vector<2x32xf32>
    %19 = tpu.matmul %17, %18, %cst_9 {dimension_numbers = #tpu.dot_dimension_numbers<[1], [0], [0], [1], [0, 0, 1, 1], [], []>} : vector<2x32xf32>, vector<32x32xf32>, vector<2x32xf32> -> vector<2x32xf32>
    %20 = vector.extract_strided_slice %19 {offsets = [0, 0], sizes = [1, 32], strides = [1, 1]} : vector<2x32xf32> to vector<1x32xf32>
    %c0_10 = arith.constant 0 : index
    %c0_11 = arith.constant 0 : index
    %c0_12 = arith.constant 0 : index
    %21 = vector.load %arg3[%c0_10, %c0_11, %c0_12] : memref<2x16x32xf32, #tpu.memory_space<vmem>>, vector<1x16x32xf32>
    %22 = vector.shape_cast %21 : vector<1x16x32xf32> to vector<16x32xf32>
    %cst_13 = arith.constant dense<0.000000e+00> : vector<1x16xf32>
    %23 = tpu.matmul %20, %22, %cst_13 {dimension_numbers = #tpu.dot_dimension_numbers<[1], [1], [0], [0], [0, 0, 1, 0], [], []>} : vector<1x32xf32>, vector<16x32xf32>, vector<1x16xf32> -> vector<1x16xf32>
    %c0_14 = arith.constant 0 : index
    %c0_15 = arith.constant 0 : index
    %24 = vector.load %arg4[%c0_14, %c0_15] : memref<2x16xi8, #tpu.memory_space<vmem>>, vector<1x16xi8>
    %c0_i8 = arith.constant 0 : i8
    %25 = vector.broadcast %c0_i8 : i8 to vector<1x16xi8>
    %26 = arith.cmpi ne, %24, %25 : vector<1x16xi8>
    %cst_16 = arith.constant -1.000000e+09 : f32
    %27 = vector.broadcast %cst_16 : f32 to vector<1x16xf32>
    %28 = arith.select %26, %23, %27 : vector<1x16xi1>, vector<1x16xf32>
    %c0_17 = arith.constant 0 : index
    %c0_18 = arith.constant 0 : index
    %29 = vector.load %arg7[%c0_17, %c0_18] : memref<2x16xf32, #tpu.memory_space<vmem>>, vector<1x16xf32>
    tpu.vector_store %arg7[%c0_17, %c0_18], %28 {strides = array<i32>} : memref<2x16xf32, #tpu.memory_space<vmem>>, vector<1x16xf32>,
    %30 = vector.extract_strided_slice %19 {offsets = [1, 0], sizes = [1, 32], strides = [1, 1]} : vector<2x32xf32> to vector<1x32xf32>
    %c1 = arith.constant 1 : index
    %c0_19 = arith.constant 0 : index
    %c0_20 = arith.constant 0 : index
    %31 = vector.load %arg3[%c1, %c0_19, %c0_20] : memref<2x16x32xf32, #tpu.memory_space<vmem>>, vector<1x16x32xf32>
    %32 = vector.shape_cast %31 : vector<1x16x32xf32> to vector<16x32xf32>
    %cst_21 = arith.constant dense<0.000000e+00> : vector<1x16xf32>
    %33 = tpu.matmul %30, %32, %cst_21 {dimension_numbers = #tpu.dot_dimension_numbers<[1], [1], [0], [0], [0, 0, 1, 0], [], []>} : vector<1x32xf32>, vector<16x32xf32>, vector<1x16xf32> -> vector<1x16xf32>
    %c1_22 = arith.constant 1 : index
    %c0_23 = arith.constant 0 : index
    %34 = vector.load %arg4[%c1_22, %c0_23] : memref<2x16xi8, #tpu.memory_space<vmem>>, vector<1x16xi8>
    %c0_i8_24 = arith.constant 0 : i8
    %35 = vector.broadcast %c0_i8_24 : i8 to vector<1x16xi8>
    %36 = arith.cmpi ne, %34, %35 : vector<1x16xi8>
    %cst_25 = arith.constant -1.000000e+09 : f32
    %37 = vector.broadcast %cst_25 : f32 to vector<1x16xf32>
    %38 = arith.select %36, %33, %37 : vector<1x16xi1>, vector<1x16xf32>
    %c1_26 = arith.constant 1 : index
    %c0_27 = arith.constant 0 : index
    %39 = vector.load %arg7[%c1_26, %c0_27] : memref<2x16xf32, #tpu.memory_space<vmem>>, vector<1x16xf32>
    tpu.vector_store %arg7[%c1_26, %c0_27], %38 {strides = array<i32>} : memref<2x16xf32, #tpu.memory_space<vmem>>, vector<1x16xf32>,
    return
  }
  func.func @transform_0(%arg0: i32) -> (i32, i32) {
    %c0_i32 = arith.constant 0 : i32
    %c0_i32_0 = arith.constant 0 : i32
    return %arg0, %c0_i32 : i32, i32
  }
  func.func @transform_1(%arg0: i32) -> (i32, i32, i32) {
    %c0_i32 = arith.constant 0 : i32
    %c0_i32_0 = arith.constant 0 : i32
    %c0_i32_1 = arith.constant 0 : i32
    return %arg0, %c0_i32, %c0_i32_0 : i32, i32, i32
  }
  func.func @transform_2(%arg0: i32) -> (i32, i32, i32) {
    %c0_i32 = arith.constant 0 : i32
    %c0_i32_0 = arith.constant 0 : i32
    %c0_i32_1 = arith.constant 0 : i32
    return %arg0, %c0_i32, %c0_i32_0 : i32, i32, i32
  }
  func.func @transform_3(%arg0: i32) -> (i32, i32) {
    %c0_i32 = arith.constant 0 : i32
    %c0_i32_0 = arith.constant 0 : i32
    return %arg0, %c0_i32 : i32, i32
  }
  func.func @transform_4(%arg0: i32) -> (i32, i32) {
    %c0_i32 = arith.constant 0 : i32
    %c0_i32_0 = arith.constant 0 : i32
    %c0_i32_1 = arith.constant 0 : i32
    return %c0_i32, %c0_i32_0 : i32, i32
  }
  func.func @transform_5(%arg0: i32) -> (i32, i32) {
    %c0_i32 = arith.constant 0 : i32
    %c0_i32_0 = arith.constant 0 : i32
    %c0_i32_1 = arith.constant 0 : i32
    return %c0_i32, %c0_i32_0 : i32, i32
  }
  func.func @transform_6(%arg0: i32) -> (i32, i32) {
    %c0_i32 = arith.constant 0 : i32
    %c0_i32_0 = arith.constant 0 : i32
    return %arg0, %c0_i32 : i32, i32
  }
}

</mosaic_0001>

<llo_original>
// kernel: tpu_custom_call.1
$region0: #{tpu_custom_call.1}
  #allocation0 [shape = 'u32[]', space=smem, size = 0x4, offset = 0x4, fixed_abs, tag = 'smem constant byte address 0x4 - core index']
  #allocation1 [shape = 'u32[144,128]{1,0:T(1,128)}', space=vmem, size = 0x12000, scoped, tag = 'internal scratch']
  %s0 = inlined_call_operand.vmem [shape: s32[2,1], index: 0, kind: input, shape index: {}]
  %s1 = inlined_call_operand.hbm [shape: f32[2,8,32], index: 1, kind: input, shape index: {}]
  %s2 = inlined_call_operand.hbm [shape: f32[2,16,32], index: 2, kind: input, shape index: {}]
  %s3 = inlined_call_operand.vmem [shape: s8[2,16], index: 3, kind: input, shape index: {}]
  %s4 = inlined_call_operand.hbm [shape: f32[32,32], index: 4, kind: input, shape index: {}]
  %s5 = inlined_call_operand.hbm [shape: f32[32,32], index: 5, kind: input, shape index: {}]
  %s6 = inlined_call_operand.hbm [shape: f32[2,16], index: 6, kind: output, shape index: {}]
  %s7 = sld [smem:[#allocation0]]
  $region50: #{tpu_custom_call.1} parent=0
    _
  %s9 = ssub.s32 1, %s7
  %s10 = scalar_select 0, %s9, %s7
  $region1: #{tpu_custom_call.1} parent=0
    #allocation2 [shape = 'u8[8192]{0}', space=vmem, size = 0x2000, scoped, tag = 'input window, operand 1, single buffered']
    #allocation3 [shape = 's32[1]{0}', space=sflag, size = 0x4, scoped, tag = 'scoped memory for tpu_custom_call.1']
    #allocation4 [shape = 's32[1]{0}', space=sflag, size = 0x4, scoped, tag = 'scoped memory for tpu_custom_call.1']
    #allocation5 [shape = 'u8[16384]{0}', space=vmem, size = 0x4000, scoped, tag = 'input window, operand 2, single buffered']
    #allocation6 [shape = 's32[1]{0}', space=sflag, size = 0x4, scoped, tag = 'scoped memory for tpu_custom_call.1']
    #allocation7 [shape = 'u8[16384]{0}', space=vmem, size = 0x4000, scoped, tag = 'input window, operand 4, single buffered']
    #allocation8 [shape = 'u8[16384]{0}', space=vmem, size = 0x4000, scoped, tag = 'input window, operand 5, single buffered']
    #allocation9 [shape = 's32[1]{0}', space=sflag, size = 0x4, scoped, tag = 'scoped memory for tpu_custom_call.1']
    #allocation10 [shape = 'u8[1024]{0}', space=vmem, size = 0x400, scoped, tag = 'output window, operand 0, single buffered']
    %11 = vsyncpa [#allocation3], 0
    %12 = vsyncpa [#allocation6], 0
    %13 = vsyncpa [#allocation9], 0
    %14 = vsyncpa [#allocation4], 0
    // Predicated region
    $region2: #{tpu_custom_call.1} parent=1 // pred_check
      _
    $region3: #{tpu_custom_call.1} parent=1 // pred_check_branch
      %16 = sbr.rel (0) target = $region5
    $region4: #{tpu_custom_call.1} parent=1 // pred_region
      _
    $region5: #{tpu_custom_call.1} parent=1 // pred_fallthru
      _
    // Predicated region
    $region6: #{tpu_custom_call.1} parent=1 // pred_check
      _
    $region7: #{tpu_custom_call.1} parent=1 // pred_check_branch
      %18 = sbr.rel (0) target = $region9
    $region8: #{tpu_custom_call.1} parent=1 // pred_region
      %s20 = ssub.s32 256, 256
      %21 = vsyncadd [#allocation3], %s20
      %s22 = sshll.u32 [#allocation2], 4
      %s23 = int_to_ptr.vmem [resolvable:$true] %s22
      %28 = dma.hbm_to_vmem [thread:$0]  %s1, 256, %s23, [#allocation3], 128, 128, 8
    $region9: #{tpu_custom_call.1} parent=1 // pred_fallthru
      _
    // Predicated region
    $region10: #{tpu_custom_call.1} parent=1 // pred_check
      _
    $region11: #{tpu_custom_call.1} parent=1 // pred_check_branch
      %30 = sbr.rel (0) target = $region13
    $region12: #{tpu_custom_call.1} parent=1 // pred_region
      %s32 = ssub.s32 512, 512
      %33 = vsyncadd [#allocation6], %s32
      %s34 = sshll.u32 [#allocation5], 4
      %s35 = int_to_ptr.vmem [resolvable:$true] %s34
      %40 = dma.hbm_to_vmem [thread:$0]  %s2, 512, %s35, [#allocation6], 128, 128, 8
    $region13: #{tpu_custom_call.1} parent=1 // pred_fallthru
      _
    // Predicated region
    $region14: #{tpu_custom_call.1} parent=1 // pred_check
      _
    $region15: #{tpu_custom_call.1} parent=1 // pred_check_branch
      %42 = sbr.rel (0) target = $region17
    $region16: #{tpu_custom_call.1} parent=1 // pred_region
      _
    $region17: #{tpu_custom_call.1} parent=1 // pred_fallthru
      _
    // Predicated region
    $region18: #{tpu_custom_call.1} parent=1 // pred_check
      _
    $region19: #{tpu_custom_call.1} parent=1 // pred_check_branch
      %44 = sbr.rel (0) target = $region21
    $region20: #{tpu_custom_call.1} parent=1 // pred_region
      %s46 = ssub.s32 512, 512
      %47 = vsyncadd [#allocation6], %s46
      %s48 = sshll.u32 [#allocation7], 4
      %s49 = int_to_ptr.vmem [resolvable:$true] %s48
      %54 = dma.hbm_to_vmem [thread:$0]  %s4, 512, %s49, [#allocation6], 128, 128, 8
    $region21: #{tpu_custom_call.1} parent=1 // pred_fallthru
      _
    // Predicated region
    $region22: #{tpu_custom_call.1} parent=1 // pred_check
      _
    $region23: #{tpu_custom_call.1} parent=1 // pred_check_branch
      %56 = sbr.rel (0) target = $region25
    $region24: #{tpu_custom_call.1} parent=1 // pred_region
      %s58 = ssub.s32 512, 512
      %59 = vsyncadd [#allocation9], %s58
      %s60 = sshll.u32 [#allocation8], 4
      %s61 = int_to_ptr.vmem [resolvable:$true] %s60
      %66 = dma.hbm_to_vmem [thread:$0]  %s5, 512, %s61, [#allocation9], 128, 128, 8
    $region25: #{tpu_custom_call.1} parent=1 // pred_fallthru
      _
    // Predicated region
    $region26: #{tpu_custom_call.1} parent=1 // pred_check
      _
    $region27: #{tpu_custom_call.1} parent=1 // pred_check_branch
      %68 = sbr.rel (0) target = $region29
    $region28: #{tpu_custom_call.1} parent=1 // pred_region
      %69 = dma.done [#allocation3], 256
    $region29: #{tpu_custom_call.1} parent=1 // pred_fallthru
      _
    // Predicated region
    $region30: #{tpu_custom_call.1} parent=1 // pred_check
      _
    $region31: #{tpu_custom_call.1} parent=1 // pred_check_branch
      %71 = sbr.rel (0) target = $region33
    $region32: #{tpu_custom_call.1} parent=1 // pred_region
      %72 = dma.done [#allocation6], 512
    $region33: #{tpu_custom_call.1} parent=1 // pred_fallthru
      _
    // Predicated region
    $region34: #{tpu_custom_call.1} parent=1 // pred_check
      _
    $region35: #{tpu_custom_call.1} parent=1 // pred_check_branch
      %74 = sbr.rel (0) target = $region37
    $region36: #{tpu_custom_call.1} parent=1 // pred_region
      %75 = dma.done [#allocation6], 512
    $region37: #{tpu_custom_call.1} parent=1 // pred_fallthru
      _
    // Predicated region
    $region38: #{tpu_custom_call.1} parent=1 // pred_check
      _
    $region39: #{tpu_custom_call.1} parent=1 // pred_check_branch
      %77 = sbr.rel (0) target = $region41
    $region40: #{tpu_custom_call.1} parent=1 // pred_region
      %78 = dma.done [#allocation9], 512
    $region41: #{tpu_custom_call.1} parent=1 // pred_fallthru
      _
    %v81 = vld [vmem:[%s0] sm:$0x3]
    %v82 = vlaneseq
    %v83 = vand.u32 %v82, 127
    %84 = vset.pattern.permute.xlu0 0
    %85 = vperm.xlu0 %84, %v81
    %v86 = vpop.permute.xlu0 %85
    %vm87 = vcmp.lt.s32.totalorder %v83, %v86
    %v88 = vsel %vm87, 1, 0
    %v89 = vcvt.s32.f32 %v88
    %v90 = vld [vmem:[#allocation2] sm:$0xff]
    %v91 = vld [vmem:[#allocation2 + $0x8] sm:$0xff]
    %v92 = vlaneseq
    %v93 = vshrl.u32 %v92, 7
    %v94 = vsub.s32 0, %v93
    %v95 = vrot.slane %v89, %v94
    %97 = vbcast.lane.b32.xlu0 %v95, 256
    %v98 = vpop.permute.xlu0 %97
    %v99 = vlaneseq
    %v100 = vshrl.u32 %v99, 7
    %v101 = vsub.s32 1, %v100
    %v102 = vrot.slane %v89, %v101
    %104 = vbcast.lane.b32.xlu0 %v102, 256
    %v105 = vpop.permute.xlu0 %104
    %v106 = vmul.f32 %v90, %v98
    %v107 = vmul.f32 %v91, %v105
    %vm108 = vcmask 261120
    %v109 = vsel %vm108, %v106, 0.0
    %v110 = vrot.slane %v109, 4
    %v111 = vadd.f32 %v109, %v110
    %v112 = vrot.slane %v111, 2
    %v113 = vadd.f32 %v111, %v112
    %v114 = vrot.slane %v113, 1
    %v115 = vadd.f32 %v113, %v114
    %v116 = vsel %vm108, %v107, 0.0
    %v117 = vrot.slane %v116, 4
    %v118 = vadd.f32 %v116, %v117
    %v119 = vrot.slane %v118, 2
    %v120 = vadd.f32 %v118, %v119
    %v121 = vrot.slane %v120, 1
    %v122 = vadd.f32 %v120, %v121
    %vm123 = vcmp.gt.s32.totalorder %v81, 1
    %v124 = vsel %vm123, %v81, 1
    %v125 = vcvt.s32.f32 %v124
    %127 = vset.pattern.permute.xlu0 0
    %128 = vperm.xlu0 %127, %v125
    %v129 = vpop.permute.xlu0 %128
    %v130 = vrot.slane %v129, 1
    %v133 = vrcp.pop %v129
    %v134 = vmul.f32 %v115, %v133
    %v135 = vrcp.pop %v130
    %v136 = vmul.f32 %v122, %v135
    %v137 = vld [vmem:[#allocation7] sm:$0xff]
    %v138 = vld [vmem:[#allocation7 + $0x8] sm:$0xff]
    %v139 = vld [vmem:[#allocation7 + $0x10] sm:$0xff]
    %v140 = vld [vmem:[#allocation7 + $0x18] sm:$0xff]
    %v143 = vrot.slane %v136, 7
    %vm144 = vcmask 1041409
    %v145 = vsel %vm144, %v143, %v134
    %v146 = vsel %vm108, %v145, 0
    %148 = vmatprep.subr.mxu0 0.0
    %149 = vmatpush1.msra.mxu0 %v137
    %150 = vmatprep.subr.mxu0 0.0
    %151 = vmatpush1.msra.mxu0 %v138
    %152 = vmatprep.subr.mxu0 0.0
    %153 = vmatpush1.msra.mxu0 %v139
    %154 = vmatprep.subr.mxu0 0.0
    %155 = vmatpush1.msra.mxu0 %v140
    %156 = vmatprep.subr.mxu0 0.0
    %157 = vmatpush1.msra.mxu0 0.0
    %158 = vmatprep.subr.mxu0 0.0
    %159 = vmatpush1.msra.mxu0 0.0
    %160 = vmatprep.subr.mxu0 0.0
    %161 = vmatpush1.msra.mxu0 0.0
    %162 = vmatprep.subr.mxu0 0.0
    %163 = vmatpush1.msra.mxu0 0.0
    %164 = vmatprep.subr.mxu0 0.0
    %165 = vmatpush1.msra.mxu0 0.0
    %166 = vmatprep.subr.mxu0 0.0
    %167 = vmatpush1.msra.mxu0 0.0
    %168 = vmatprep.subr.mxu0 0.0
    %169 = vmatpush1.msra.mxu0 0.0
    %170 = vmatprep.subr.mxu0 0.0
    %171 = vmatpush1.msra.mxu0 0.0
    %172 = vmatprep.subr.mxu0 0.0
    %173 = vmatpush1.msra.mxu0 0.0
    %174 = vmatprep.subr.mxu0 0.0
    %175 = vmatpush1.msra.mxu0 0.0
    %176 = vmatprep.subr.mxu0 0.0
    %177 = vmatpush1.msra.mxu0 0.0
    %178 = vmatprep.subr.mxu0 0.0
    %179 = vmatpush1.msra.mxu0 0.0
    %180 = vmatprep.subr.mxu0 0.0
    %181 = vmatpush1.msra.mxu0 0.0
    %182 = vmatprep.subr.mxu0 0.0
    %183 = vmatpush1.msra.mxu0 0.0
    %184 = vmatprep.subr.mxu0 0.0
    %185 = vmatpush1.msra.mxu0 0.0
    %186 = vmatprep.subr.mxu0 0.0
    %187 = vmatpush1.msra.mxu0 0.0
    %188 = vmatprep.subr.mxu0 0.0
    %189 = vmatpush1.msra.mxu0 0.0
    %190 = vmatprep.subr.mxu0 0.0
    %191 = vmatpush1.msra.mxu0 0.0
    %192 = vmatprep.subr.mxu0 0.0
    %193 = vmatpush1.msra.mxu0 0.0
    %194 = vmatprep.subr.mxu0 0.0
    %195 = vmatpush1.msra.mxu0 0.0
    %196 = vmatprep.subr.mxu0 0.0
    %197 = vmatpush1.msra.mxu0 0.0
    %198 = vmatprep.subr.mxu0 0.0
    %199 = vmatpush1.msra.mxu0 0.0
    %200 = vmatprep.subr.mxu0 0.0
    %201 = vmatpush1.msra.mxu0 0.0
    %202 = vmatprep.subr.mxu0 0.0
    %203 = vmatpush1.msra.mxu0 0.0
    %204 = vmatprep.subr.mxu0 0.0
    %205 = vmatpush1.msra.mxu0 0.0
    %206 = vmatprep.subr.mxu0 0.0
    %207 = vmatpush1.msra.mxu0 0.0
    %208 = vmatprep.subr.mxu0 0.0
    %209 = vmatpush1.msra.mxu0 0.0
    %210 = vmatprep.subr.mxu0 0.0
    %211 = vmatpush1.msra.mxu0 0.0
    %212 = vmatprep.mubr.f32.mxu0 0.0
    %213 = vmatmul.mubr.f32.gmra.mrb[0].mxu0 %v146
    %v214 = vpop.f32.mrb[0].mxu0
    %v215 = vadd.f32 0.0, %v214
    %v216 = vpop.f32.mrb[0].mxu0
    %217 = vdwg.mxu0
    %v218 = vld [vmem:[#allocation8] sm:$0xff]
    %v219 = vld [vmem:[#allocation8 + $0x8] sm:$0xff]
    %v220 = vld [vmem:[#allocation8 + $0x10] sm:$0xff]
    %v221 = vld [vmem:[#allocation8 + $0x18] sm:$0xff]
    %v223 = vsel %vm108, %v215, 0
    %225 = vmatprep.subr.mxu0 0.0
    %226 = vmatpush1.msra.mxu0 %v218
    %227 = vmatprep.subr.mxu0 0.0
    %228 = vmatpush1.msra.mxu0 %v219
    %229 = vmatprep.subr.mxu0 0.0
    %230 = vmatpush1.msra.mxu0 %v220
    %231 = vmatprep.subr.mxu0 0.0
    %232 = vmatpush1.msra.mxu0 %v221
    %233 = vmatprep.subr.mxu0 0.0
    %234 = vmatpush1.msra.mxu0 0.0
    %235 = vmatprep.subr.mxu0 0.0
    %236 = vmatpush1.msra.mxu0 0.0
    %237 = vmatprep.subr.mxu0 0.0
    %238 = vmatpush1.msra.mxu0 0.0
    %239 = vmatprep.subr.mxu0 0.0
    %240 = vmatpush1.msra.mxu0 0.0
    %241 = vmatprep.subr.mxu0 0.0
    %242 = vmatpush1.msra.mxu0 0.0
    %243 = vmatprep.subr.mxu0 0.0
    %244 = vmatpush1.msra.mxu0 0.0
    %245 = vmatprep.subr.mxu0 0.0
    %246 = vmatpush1.msra.mxu0 0.0
    %247 = vmatprep.subr.mxu0 0.0
    %248 = vmatpush1.msra.mxu0 0.0
    %249 = vmatprep.subr.mxu0 0.0
    %250 = vmatpush1.msra.mxu0 0.0
    %251 = vmatprep.subr.mxu0 0.0
    %252 = vmatpush1.msra.mxu0 0.0
    %253 = vmatprep.subr.mxu0 0.0
    %254 = vmatpush1.msra.mxu0 0.0
    %255 = vmatprep.subr.mxu0 0.0
    %256 = vmatpush1.msra.mxu0 0.0
    %257 = vmatprep.subr.mxu0 0.0
    %258 = vmatpush1.msra.mxu0 0.0
    %259 = vmatprep.subr.mxu0 0.0
    %260 = vmatpush1.msra.mxu0 0.0
    %261 = vmatprep.subr.mxu0 0.0
    %262 = vmatpush1.msra.mxu0 0.0
    %263 = vmatprep.subr.mxu0 0.0
    %264 = vmatpush1.msra.mxu0 0.0
    %265 = vmatprep.subr.mxu0 0.0
    %266 = vmatpush1.msra.mxu0 0.0
    %267 = vmatprep.subr.mxu0 0.0
    %268 = vmatpush1.msra.mxu0 0.0
    %269 = vmatprep.subr.mxu0 0.0
    %270 = vmatpush1.msra.mxu0 0.0
    %271 = vmatprep.subr.mxu0 0.0
    %272 = vmatpush1.msra.mxu0 0.0
    %273 = vmatprep.subr.mxu0 0.0
    %274 = vmatpush1.msra.mxu0 0.0
    %275 = vmatprep.subr.mxu0 0.0
    %276 = vmatpush1.msra.mxu0 0.0
    %277 = vmatprep.subr.mxu0 0.0
    %278 = vmatpush1.msra.mxu0 0.0
    %279 = vmatprep.subr.mxu0 0.0
    %280 = vmatpush1.msra.mxu0 0.0
    %281 = vmatprep.subr.mxu0 0.0
    %282 = vmatpush1.msra.mxu0 0.0
    %283 = vmatprep.subr.mxu0 0.0
    %284 = vmatpush1.msra.mxu0 0.0
    %285 = vmatprep.subr.mxu0 0.0
    %286 = vmatpush1.msra.mxu0 0.0
    %287 = vmatprep.subr.mxu0 0.0
    %288 = vmatpush1.msra.mxu0 0.0
    %289 = vmatprep.mubr.f32.mxu0 0.0
    %290 = vmatmul.mubr.f32.gmra.mrb[0].mxu0 %v223
    %v291 = vpop.f32.mrb[0].mxu0
    %v292 = vadd.f32 0.0, %v291
    %v293 = vpop.f32.mrb[0].mxu0
    %294 = vdwg.mxu0
    %v295 = vld [vmem:[#allocation5] sm:$0xff]
    %v296 = vld [vmem:[#allocation5 + $0x8] sm:$0xff]
    %v298 = vsel %vm108, %v292, 0
    %v301 = vsel %vm108, %v295, 0
    %v304 = vsel %vm108, %v296, 0
    %306 = vmatprep.subr.mxu0 0.0
    %307 = vmatpush1.xpose.msra.mxu0 %v301
    %308 = vmatprep.subr.mxu0 0.0
    %309 = vmatpush1.xpose.msra.mxu0 %v304
    %310 = vmatprep.subr.mxu0 0.0
    %311 = vmatpush1.xpose.msra.mxu0 0.0
    %312 = vmatprep.subr.mxu0 0.0
    %313 = vmatpush1.xpose.msra.mxu0 0.0
    %314 = vmatprep.subr.mxu0 0.0
    %315 = vmatpush1.xpose.msra.mxu0 0.0
    %316 = vmatprep.subr.mxu0 0.0
    %317 = vmatpush1.xpose.msra.mxu0 0.0
    %318 = vmatprep.subr.mxu0 0.0
    %319 = vmatpush1.xpose.msra.mxu0 0.0
    %320 = vmatprep.subr.mxu0 0.0
    %321 = vmatpush1.xpose.msra.mxu0 0.0
    %322 = vmatprep.subr.mxu0 0.0
    %323 = vmatpush1.xpose.msra.mxu0 0.0
    %324 = vmatprep.subr.mxu0 0.0
    %325 = vmatpush1.xpose.msra.mxu0 0.0
    %326 = vmatprep.subr.mxu0 0.0
    %327 = vmatpush1.xpose.msra.mxu0 0.0
    %328 = vmatprep.subr.mxu0 0.0
    %329 = vmatpush1.xpose.msra.mxu0 0.0
    %330 = vmatprep.subr.mxu0 0.0
    %331 = vmatpush1.xpose.msra.mxu0 0.0
    %332 = vmatprep.subr.mxu0 0.0
    %333 = vmatpush1.xpose.msra.mxu0 0.0
    %334 = vmatprep.subr.mxu0 0.0
    %335 = vmatpush1.xpose.msra.mxu0 0.0
    %336 = vmatprep.subr.mxu0 0.0
    %337 = vmatpush1.xpose.msra.mxu0 0.0
    %338 = vmatprep.subr.mxu0 0.0
    %339 = vmatpush1.xpose.msra.mxu0 0.0
    %340 = vmatprep.subr.mxu0 0.0
    %341 = vmatpush1.xpose.msra.mxu0 0.0
    %342 = vmatprep.subr.mxu0 0.0
    %343 = vmatpush1.xpose.msra.mxu0 0.0
    %344 = vmatprep.subr.mxu0 0.0
    %345 = vmatpush1.xpose.msra.mxu0 0.0
    %346 = vmatprep.subr.mxu0 0.0
    %347 = vmatpush1.xpose.msra.mxu0 0.0
    %348 = vmatprep.subr.mxu0 0.0
    %349 = vmatpush1.xpose.msra.mxu0 0.0
    %350 = vmatprep.subr.mxu0 0.0
    %351 = vmatpush1.xpose.msra.mxu0 0.0
    %352 = vmatprep.subr.mxu0 0.0
    %353 = vmatpush1.xpose.msra.mxu0 0.0
    %354 = vmatprep.subr.mxu0 0.0
    %355 = vmatpush1.xpose.msra.mxu0 0.0
    %356 = vmatprep.subr.mxu0 0.0
    %357 = vmatpush1.xpose.msra.mxu0 0.0
    %358 = vmatprep.subr.mxu0 0.0
    %359 = vmatpush1.xpose.msra.mxu0 0.0
    %360 = vmatprep.subr.mxu0 0.0
    %361 = vmatpush1.xpose.msra.mxu0 0.0
    %362 = vmatprep.subr.mxu0 0.0
    %363 = vmatpush1.xpose.msra.mxu0 0.0
    %364 = vmatprep.subr.mxu0 0.0
    %365 = vmatpush1.xpose.msra.mxu0 0.0
    %366 = vmatprep.subr.mxu0 0.0
    %367 = vmatpush1.xpose.msra.mxu0 0.0
    %368 = vmatprep.subr.mxu0 0.0
    %369 = vmatpush1.xpose.msra.mxu0 0.0
    %370 = vmatprep.mubr.f32.mxu0 0.0
    %371 = vmatmul.mubr.f32.gmra.mrb[0].mxu0 %v298
    %v372 = vpop.f32.mrb[0].mxu0
    %v373 = vadd.f32 0.0, %v372
    %v374 = vpop.f32.mrb[0].mxu0
    %375 = vdwg.mxu0
    %v376 = vld [vmem:[%s3] sm:$0x1]
    %vm377 = vnez %v376
    %v378 = vsel %vm377, 16843009, 0
    %v379 = vunpack.c.0.s8 %v378
    %vm380 = vcmp.ne.s32.totalorder %v379, 0
    %v381 = vsel %vm380, %v373, -1e+09
    %vm382 = vcmask 122880
    %383 = vst.msk [vmem:[#allocation10] sm:$0x1] %vm382, %v381
    %s384 = scalar_lea.vmem [#allocation5], 16
    %v385 = vld [vmem:[%s384] sm:$0xff]
    %v386 = vld [vmem:[%s384 + $0x8] sm:$0xff]
    %v387 = vrot.slane %v292, 1
    %v388 = vsel %vm108, %v387, 0
    %v391 = vsel %vm108, %v385, 0
    %v394 = vsel %vm108, %v386, 0
    %396 = vmatprep.subr.mxu0 0.0
    %397 = vmatpush1.xpose.msra.mxu0 %v391
    %398 = vmatprep.subr.mxu0 0.0
    %399 = vmatpush1.xpose.msra.mxu0 %v394
    %400 = vmatprep.subr.mxu0 0.0
    %401 = vmatpush1.xpose.msra.mxu0 0.0
    %402 = vmatprep.subr.mxu0 0.0
    %403 = vmatpush1.xpose.msra.mxu0 0.0
    %404 = vmatprep.subr.mxu0 0.0
    %405 = vmatpush1.xpose.msra.mxu0 0.0
    %406 = vmatprep.subr.mxu0 0.0
    %407 = vmatpush1.xpose.msra.mxu0 0.0
    %408 = vmatprep.subr.mxu0 0.0
    %409 = vmatpush1.xpose.msra.mxu0 0.0
    %410 = vmatprep.subr.mxu0 0.0
    %411 = vmatpush1.xpose.msra.mxu0 0.0
    %412 = vmatprep.subr.mxu0 0.0
    %413 = vmatpush1.xpose.msra.mxu0 0.0
    %414 = vmatprep.subr.mxu0 0.0
    %415 = vmatpush1.xpose.msra.mxu0 0.0
    %416 = vmatprep.subr.mxu0 0.0
    %417 = vmatpush1.xpose.msra.mxu0 0.0
    %418 = vmatprep.subr.mxu0 0.0
    %419 = vmatpush1.xpose.msra.mxu0 0.0
    %420 = vmatprep.subr.mxu0 0.0
    %421 = vmatpush1.xpose.msra.mxu0 0.0
    %422 = vmatprep.subr.mxu0 0.0
    %423 = vmatpush1.xpose.msra.mxu0 0.0
    %424 = vmatprep.subr.mxu0 0.0
    %425 = vmatpush1.xpose.msra.mxu0 0.0
    %426 = vmatprep.subr.mxu0 0.0
    %427 = vmatpush1.xpose.msra.mxu0 0.0
    %428 = vmatprep.subr.mxu0 0.0
    %429 = vmatpush1.xpose.msra.mxu0 0.0
    %430 = vmatprep.subr.mxu0 0.0
    %431 = vmatpush1.xpose.msra.mxu0 0.0
    %432 = vmatprep.subr.mxu0 0.0
    %433 = vmatpush1.xpose.msra.mxu0 0.0
    %434 = vmatprep.subr.mxu0 0.0
    %435 = vmatpush1.xpose.msra.mxu0 0.0
    %436 = vmatprep.subr.mxu0 0.0
    %437 = vmatpush1.xpose.msra.mxu0 0.0
    %438 = vmatprep.subr.mxu0 0.0
    %439 = vmatpush1.xpose.msra.mxu0 0.0
    %440 = vmatprep.subr.mxu0 0.0
    %441 = vmatpush1.xpose.msra.mxu0 0.0
    %442 = vmatprep.subr.mxu0 0.0
    %443 = vmatpush1.xpose.msra.mxu0 0.0
    %444 = vmatprep.subr.mxu0 0.0
    %445 = vmatpush1.xpose.msra.mxu0 0.0
    %446 = vmatprep.subr.mxu0 0.0
    %447 = vmatpush1.xpose.msra.mxu0 0.0
    %448 = vmatprep.subr.mxu0 0.0
    %449 = vmatpush1.xpose.msra.mxu0 0.0
    %450 = vmatprep.subr.mxu0 0.0
    %451 = vmatpush1.xpose.msra.mxu0 0.0
    %452 = vmatprep.subr.mxu0 0.0
    %453 = vmatpush1.xpose.msra.mxu0 0.0
    %454 = vmatprep.subr.mxu0 0.0
    %455 = vmatpush1.xpose.msra.mxu0 0.0
    %456 = vmatprep.subr.mxu0 0.0
    %457 = vmatpush1.xpose.msra.mxu0 0.0
    %458 = vmatprep.subr.mxu0 0.0
    %459 = vmatpush1.xpose.msra.mxu0 0.0
    %460 = vmatprep.mubr.f32.mxu0 0.0
    %461 = vmatmul.mubr.f32.gmra.mrb[0].mxu0 %v388
    %v462 = vpop.f32.mrb[0].mxu0
    %v463 = vadd.f32 0.0, %v462
    %v464 = vpop.f32.mrb[0].mxu0
    %465 = vdwg.mxu0
    %v466 = vld [vmem:[%s3] sm:$0x1]
    %vm467 = vnez %v466
    %v468 = vsel %vm467, 16843009, 0
    %v469 = vunpack.c.0.s8 %v468
    %vm470 = vcmp.ne.s32.totalorder %v469, 0
    %v471 = vsel %vm470, 1, 0
    %v472 = vlaneseq
    %v473 = vshrl.u32 %v472, 7
    %v474 = vsub.s32 1, %v473
    %v475 = vrot.slane %v471, %v474
    %vm476 = vcmp.ne.s32.totalorder %v475, 0
    %v477 = vsel %vm476, %v463, -1e+09
    %478 = vst.msk [vmem:[#allocation10 + $0x1] sm:$0x1] %vm382, %v477
    // Predicated region
    $region42: #{tpu_custom_call.1} parent=1 // pred_check
      _
    $region43: #{tpu_custom_call.1} parent=1 // pred_check_branch
      %480 = sbr.rel (0) target = $region45
    $region44: #{tpu_custom_call.1} parent=1 // pred_region
      %s482 = ssub.s32 32, 32
      %483 = vsyncadd [#allocation4], %s482
      %s485 = sshll.u32 [#allocation10], 4
      %s486 = int_to_ptr.vmem [resolvable:$true] %s485
      %488 = dma.vmem_to_hbm [thread:$0]  %s486, 32, %s6, [#allocation4]
    $region45: #{tpu_custom_call.1} parent=1 // pred_fallthru
      _
    // Predicated region
    $region46: #{tpu_custom_call.1} parent=1 // pred_check
      _
    $region47: #{tpu_custom_call.1} parent=1 // pred_check_branch
      %490 = sbr.rel (0) target = $region49
    $region48: #{tpu_custom_call.1} parent=1 // pred_region
      %491 = dma.done [#allocation4], 32
    $region49: #{tpu_custom_call.1} parent=1 // pred_fallthru
      _
    %492 = vsyncpa [#allocation3], 1
    %493 = vsyncpa [#allocation6], 1
    %494 = vsyncpa [#allocation9], 1
    %495 = vsyncpa [#allocation4], 1

</llo_original>
